<compile_context>
chip_gen: v7x
topology: tpu7x:2x2x1
jax: 0.10.0
libtpu: 0.0.40
codegen_flags: <defaults>
</compile_context>

<pallas_src>
import jax
import jax.numpy as jnp
from jax.experimental import pallas as pl
from jax.experimental.pallas import tpu as pltpu

LANE = 128


def _round_up(n, m):
    return ((n + m - 1) // m) * m


def mlp_encoder_kernel(x_ref, w1_ref, b1_ref, w2_ref, b2_ref, wmu_ref, bmu_ref, o_ref):
    # x arrives as f32 (unpadded K); cast to bf16 in-VMEM for the MXU.
    x = x_ref[...].astype(jnp.bfloat16)

    # ---- layer 1: Linear (BN pre-folded) -> ReLU -> Dropout(0.0) = identity ----
    h = jnp.dot(x, w1_ref[...], preferred_element_type=jnp.float32)
    h = jnp.maximum(h + b1_ref[...], 0.0)

    # ---- layer 2: Linear (BN pre-folded) -> ReLU -> Dropout(0.0) = identity ----
    h2 = jnp.dot(h.astype(jnp.bfloat16), w2_ref[...],
                 preferred_element_type=jnp.float32)
    h2 = jnp.maximum(h2 + b2_ref[...], 0.0)

    # ---- mu head (output columns zero-padded to lane width in the wrapper) ----
    mu = jnp.dot(h2.astype(jnp.bfloat16), wmu_ref[...],
                 preferred_element_type=jnp.float32)
    o_ref[...] = (mu + bmu_ref[...]).astype(o_ref.dtype)   # bf16 store


def _fold_bn_and_pad(params, out_pad):
    """Fold eval-mode BatchNorm into the Linear weights; pad only the mu-head N."""
    (w1, b1, s1, t1, w2, b2, s2, t2, wmu, bmu) = params
    # (x @ w + b) * s + t  ==  x @ (w * s) + (b * s + t)
    w1f = w1 * s1
    b1f = b1 * s1 + t1
    w2f = w2 * s2
    b2f = b2 * s2 + t2

    out_dim = wmu.shape[1]
    wmuf = jnp.pad(wmu, ((0, 0), (0, out_pad - out_dim)))
    bmuf = jnp.pad(bmu, ((0, 0), (0, out_pad - out_dim)))

    # bf16 weights feed the MXU; biases stay f32 and are added post-matmul.
    return (w1f.astype(jnp.bfloat16), b1f,
            w2f.astype(jnp.bfloat16), b2f,
            wmuf.astype(jnp.bfloat16), bmuf)


def _choose_tile(B, block_rows):
    """Batch tile: multiple of 16 rows (bf16 sublanes); cap so grid has >=2 steps."""
    b16 = _round_up(B, 16)
    if b16 <= 16:
        return b16
    half = _round_up((b16 + 1) // 2, 16)   # >=2 grid steps -> both v7x TCs busy
    return min(block_rows, half)


def mlp_encoder_forward(x, params, *, block_rows=2048):
    """x: [B, in_dim] float32. Returns mu: [B, out_dim] bfloat16.

    (Cast to f32 after this call if the consumer needs it; the kernel output
    stream is kept bf16 to halve HBM writeback.)
    """
    B, in_dim = x.shape
    h1 = params[0].shape[1]               # 256
    h2 = params[4].shape[1]               # 128
    out_dim = params[8].shape[1]          # wmu is (hidden[-1], out_dim)

    out_pad = _round_up(out_dim, LANE)
    w1, b1, w2, b2, wmu, bmu = _fold_bn_and_pad(params, out_pad)

    tb = _choose_tile(B, block_rows)
    b_pad = _round_up(B, tb)
    # Only the batch axis is (possibly) padded; K stays at in_dim, x stays f32.
    x_p = x if b_pad == B else jnp.pad(x, ((0, b_pad - B), (0, 0)))

    grid = (b_pad // tb,)
    cost = pl.CostEstimate(
        flops=2 * b_pad * (in_dim * h1 + h1 * h2 + h2 * out_pad),
        transcendentals=0,
        bytes_accessed=b_pad * (in_dim * 4 + out_pad * 2)
        + (in_dim * h1 + h1 * h2 + h2 * out_pad) * 2
        + (h1 + h2 + out_pad) * 4,
    )

    out = pl.pallas_call(
        mlp_encoder_kernel,
        out_shape=jax.ShapeDtypeStruct((b_pad, out_pad), jnp.bfloat16),
        grid=grid,
        in_specs=[
            # x streamed per batch tile, unpadded K (last dim == full array dim).
            pl.BlockSpec((tb, in_dim), lambda i: (i, 0)),
            # weights / biases VMEM-resident (constant index maps).
            pl.BlockSpec(w1.shape, lambda i: (0, 0)),
            pl.BlockSpec(b1.shape, lambda i: (0, 0)),
            pl.BlockSpec(w2.shape, lambda i: (0, 0)),
            pl.BlockSpec(b2.shape, lambda i: (0, 0)),
            pl.BlockSpec(wmu.shape, lambda i: (0, 0)),
            pl.BlockSpec(bmu.shape, lambda i: (0, 0)),
        ],
        out_specs=pl.BlockSpec((tb, out_pad), lambda i: (i, 0)),
        compiler_params=pltpu.CompilerParams(
            dimension_semantics=("parallel",),      # shards batch over v7x's 2 TCs
            vmem_limit_bytes=48 * 1024 * 1024,      # safe on v7x's 64 MiB VMEM
        ),
        cost_estimate=cost,
    )(x_p, w1, b1, w2, b2, wmu, bmu)

    # TODO(synk): downstream consumers could accept the padded (b_pad, 128) bf16
    # slab directly and skip this slice entirely.
    return out[:B, :out_dim]


def make_params(key, in_dim, out_dim, hidden_dims=(256, 128), bn_eps=1e-5):
    """Deterministic synthetic parameters matching mlp_encoder.__init__ shapes."""
    dims = [in_dim] + list(hidden_dims)
    keys = jax.random.split(key, 16)
    k = iter(keys)

    def linear(kw, kb, d_in, d_out):
        # PyTorch Linear weight is (out, in); store transposed (in, out) for the kernel.
        w = jax.random.normal(kw, (d_in, d_out), jnp.float32) * (1.0 / jnp.sqrt(d_in))
        b = jax.random.normal(kb, (1, d_out), jnp.float32) * 0.01
        return w, b

    def bn_fold(kg, kb, km, kv, d):
        gamma = 1.0 + 0.1 * jax.random.normal(kg, (1, d), jnp.float32)
        beta = 0.1 * jax.random.normal(kb, (1, d), jnp.float32)
        running_mean = 0.1 * jax.random.normal(km, (1, d), jnp.float32)
        running_var = jnp.abs(jax.random.normal(kv, (1, d), jnp.float32)) + 0.5
        scale = gamma / jnp.sqrt(running_var + bn_eps)
        shift = beta - running_mean * scale
        return scale, shift

    w1, b1 = linear(next(k), next(k), dims[0], dims[1])
    s1, t1 = bn_fold(next(k), next(k), next(k), next(k), dims[1])
    w2, b2 = linear(next(k), next(k), dims[1], dims[2])
    s2, t2 = bn_fold(next(k), next(k), next(k), next(k), dims[2])
    wmu, bmu = linear(next(k), next(k), dims[2], out_dim)
    # TODO(synk): logvar head exists in the module but is unused when info_model=False.
    return (w1, b1, s1, t1, w2, b2, s2, t2, wmu, bmu)


def reference_forward(x, params):
    """Pure-JAX f32 reference of the original (un-folded) module math."""
    (w1, b1, s1, t1, w2, b2, s2, t2, wmu, bmu) = params
    h = jnp.maximum((x @ w1 + b1) * s1 + t1, 0.0)
    h = jnp.maximum((h @ w2 + b2) * s2 + t2, 0.0)
    return h @ wmu + bmu


if __name__ == "__main__":
    B, in_dim, out_dim = 8, 32, 8
    key = jax.random.PRNGKey(0)
    kx, kp = jax.random.split(key)
    x = jax.random.normal(kx, (B, in_dim), jnp.float32)
    params = make_params(kp, in_dim, out_dim)

    mu = jax.block_until_ready(mlp_encoder_forward(x, params))
    ref = reference_forward(x, params)

    assert mu.shape == (B, out_dim)
    assert mu.dtype == jnp.bfloat16
    # bf16 inputs/weights/output (f32 accumulation) -> relaxed tolerance vs f32 ref.
    assert jnp.allclose(mu.astype(jnp.float32), ref, atol=1e-1, rtol=5e-2), \
        "mismatch vs reference"
    print("KERNEL_OK")
</pallas_src>

<mosaic_0001>
module attributes {stable_mosaic.version = 11 : i64} {
  func.func @mlp_encoder_kernel(%arg0: i32, %arg1: memref<16x32xf32, #tpu.memory_space<vmem>>, %arg2: memref<32x256xbf16, #tpu.memory_space<vmem>>, %arg3: memref<1x256xf32, #tpu.memory_space<vmem>>, %arg4: memref<256x128xbf16, #tpu.memory_space<vmem>>, %arg5: memref<1x128xf32, #tpu.memory_space<vmem>>, %arg6: memref<128x128xbf16, #tpu.memory_space<vmem>>, %arg7: memref<1x128xf32, #tpu.memory_space<vmem>>, %arg8: memref<16x128xbf16, #tpu.memory_space<vmem>>) attributes {dimension_semantics = [#tpu.dimension_semantics<parallel>], iteration_bounds = array<i64: 1>, scalar_prefetch = 0 : i64, scratch_operands = 0 : i64, tpu.core_type = #tpu.core_type<tc>, window_params = [{transform_indices = @transform_0, window_bounds = array<i64: 16, 32>}, {pipeline_mode = #tpu.pipeline_mode<synchronous>, transform_indices = @transform_1, window_bounds = array<i64: 32, 256>}, {pipeline_mode = #tpu.pipeline_mode<synchronous>, transform_indices = @transform_2, window_bounds = array<i64: 1, 256>}, {pipeline_mode = #tpu.pipeline_mode<synchronous>, transform_indices = @transform_3, window_bounds = array<i64: 256, 128>}, {pipeline_mode = #tpu.pipeline_mode<synchronous>, transform_indices = @transform_4, window_bounds = array<i64: 1, 128>}, {pipeline_mode = #tpu.pipeline_mode<synchronous>, transform_indices = @transform_5, window_bounds = array<i64: 128, 128>}, {pipeline_mode = #tpu.pipeline_mode<synchronous>, transform_indices = @transform_6, window_bounds = array<i64: 1, 128>}, {transform_indices = @transform_7, window_bounds = array<i64: 16, 128>}]} {
    %c0 = arith.constant 0 : index
    %c0_0 = arith.constant 0 : index
    %0 = vector.load %arg1[%c0, %c0_0] : memref<16x32xf32, #tpu.memory_space<vmem>>, vector<16x32xf32>
    %1 = arith.truncf %0 : vector<16x32xf32> to vector<16x32xbf16>
    %c0_1 = arith.constant 0 : index
    %c0_2 = arith.constant 0 : index
    %2 = vector.load %arg2[%c0_1, %c0_2] : memref<32x256xbf16, #tpu.memory_space<vmem>>, vector<32x256xbf16>
    %cst = arith.constant dense<0.000000e+00> : vector<16x256xf32>
    %3 = tpu.matmul %1, %2, %cst {dimension_numbers = #tpu.dot_dimension_numbers<[1], [0], [0], [1], [0, 0, 1, 1], [], []>} : vector<16x32xbf16>, vector<32x256xbf16>, vector<16x256xf32> -> vector<16x256xf32>
    %c0_3 = arith.constant 0 : index
    %c0_4 = arith.constant 0 : index
    %4 = vector.load %arg3[%c0_3, %c0_4] : memref<1x256xf32, #tpu.memory_space<vmem>>, vector<1x256xf32>
    %5 = vector.broadcast %4 : vector<1x256xf32> to vector<16x256xf32>
    %6 = arith.addf %3, %5 : vector<16x256xf32>
    %cst_5 = arith.constant 0.000000e+00 : f32
    %7 = vector.broadcast %cst_5 : f32 to vector<16x256xf32>
    %8 = arith.maximumf %6, %7 : vector<16x256xf32>
    %9 = arith.truncf %8 : vector<16x256xf32> to vector<16x256xbf16>
    %c0_6 = arith.constant 0 : index
    %c0_7 = arith.constant 0 : index
    %10 = vector.load %arg4[%c0_6, %c0_7] : memref<256x128xbf16, #tpu.memory_space<vmem>>, vector<256x128xbf16>
    %cst_8 = arith.constant dense<0.000000e+00> : vector<16x128xf32>
    %11 = tpu.matmul %9, %10, %cst_8 {dimension_numbers = #tpu.dot_dimension_numbers<[1], [0], [0], [1], [0, 0, 1, 1], [], []>} : vector<16x256xbf16>, vector<256x128xbf16>, vector<16x128xf32> -> vector<16x128xf32>
    %c0_9 = arith.constant 0 : index
    %c0_10 = arith.constant 0 : index
    %12 = vector.load %arg5[%c0_9, %c0_10] : memref<1x128xf32, #tpu.memory_space<vmem>>, vector<1x128xf32>
    %13 = vector.broadcast %12 : vector<1x128xf32> to vector<16x128xf32>
    %14 = arith.addf %11, %13 : vector<16x128xf32>
    %cst_11 = arith.constant 0.000000e+00 : f32
    %15 = vector.broadcast %cst_11 : f32 to vector<16x128xf32>
    %16 = arith.maximumf %14, %15 : vector<16x128xf32>
    %17 = arith.truncf %16 : vector<16x128xf32> to vector<16x128xbf16>
    %c0_12 = arith.constant 0 : index
    %c0_13 = arith.constant 0 : index
    %18 = vector.load %arg6[%c0_12, %c0_13] : memref<128x128xbf16, #tpu.memory_space<vmem>>, vector<128x128xbf16>
    %cst_14 = arith.constant dense<0.000000e+00> : vector<16x128xf32>
    %19 = tpu.matmul %17, %18, %cst_14 {dimension_numbers = #tpu.dot_dimension_numbers<[1], [0], [0], [1], [0, 0, 1, 1], [], []>} : vector<16x128xbf16>, vector<128x128xbf16>, vector<16x128xf32> -> vector<16x128xf32>
    %c0_15 = arith.constant 0 : index
    %c0_16 = arith.constant 0 : index
    %20 = vector.load %arg7[%c0_15, %c0_16] : memref<1x128xf32, #tpu.memory_space<vmem>>, vector<1x128xf32>
    %21 = vector.broadcast %20 : vector<1x128xf32> to vector<16x128xf32>
    %22 = arith.addf %19, %21 : vector<16x128xf32>
    %23 = arith.truncf %22 : vector<16x128xf32> to vector<16x128xbf16>
    %c0_17 = arith.constant 0 : index
    %c0_18 = arith.constant 0 : index
    %24 = vector.load %arg8[%c0_17, %c0_18] : memref<16x128xbf16, #tpu.memory_space<vmem>>, vector<16x128xbf16>
    tpu.vector_store %arg8[%c0_17, %c0_18], %23 {strides = array<i32>} : memref<16x128xbf16, #tpu.memory_space<vmem>>, vector<16x128xbf16>,
    return
  }
  func.func @transform_0(%arg0: i32) -> (i32, i32) {
    %c0_i32 = arith.constant 0 : i32
    %c0_i32_0 = arith.constant 0 : i32
    return %arg0, %c0_i32 : i32, i32
  }
  func.func @transform_1(%arg0: i32) -> (i32, i32) {
    %c0_i32 = arith.constant 0 : i32
    %c0_i32_0 = arith.constant 0 : i32
    %c0_i32_1 = arith.constant 0 : i32
    return %c0_i32, %c0_i32_0 : i32, i32
  }
  func.func @transform_2(%arg0: i32) -> (i32, i32) {
    %c0_i32 = arith.constant 0 : i32
    %c0_i32_0 = arith.constant 0 : i32
    %c0_i32_1 = arith.constant 0 : i32
    return %c0_i32, %c0_i32_0 : i32, i32
  }
  func.func @transform_3(%arg0: i32) -> (i32, i32) {
    %c0_i32 = arith.constant 0 : i32
    %c0_i32_0 = arith.constant 0 : i32
    %c0_i32_1 = arith.constant 0 : i32
    return %c0_i32, %c0_i32_0 : i32, i32
  }
  func.func @transform_4(%arg0: i32) -> (i32, i32) {
    %c0_i32 = arith.constant 0 : i32
    %c0_i32_0 = arith.constant 0 : i32
    %c0_i32_1 = arith.constant 0 : i32
    return %c0_i32, %c0_i32_0 : i32, i32
  }
  func.func @transform_5(%arg0: i32) -> (i32, i32) {
    %c0_i32 = arith.constant 0 : i32
    %c0_i32_0 = arith.constant 0 : i32
    %c0_i32_1 = arith.constant 0 : i32
    return %c0_i32, %c0_i32_0 : i32, i32
  }
  func.func @transform_6(%arg0: i32) -> (i32, i32) {
    %c0_i32 = arith.constant 0 : i32
    %c0_i32_0 = arith.constant 0 : i32
    %c0_i32_1 = arith.constant 0 : i32
    return %c0_i32, %c0_i32_0 : i32, i32
  }
  func.func @transform_7(%arg0: i32) -> (i32, i32) {
    %c0_i32 = arith.constant 0 : i32
    %c0_i32_0 = arith.constant 0 : i32
    return %arg0, %c0_i32 : i32, i32
  }
}

</mosaic_0001>

<llo_original>
// kernel: tpu_custom_call.1
$region0: #{tpu_custom_call.1}
  #allocation0 [shape = 'u32[]', space=smem, size = 0x4, offset = 0x4, fixed_abs, tag = 'smem constant byte address 0x4 - core index']
  #allocation1 [shape = 'u32[144,128]{1,0:T(1,128)}', space=vmem, size = 0x12000, scoped, tag = 'internal scratch']
  %s0 = inlined_call_operand.hbm [shape: f32[16,32], index: 0, kind: input, shape index: {}]
  %s1 = inlined_call_operand.hbm [shape: bf16[32,256], index: 1, kind: input, shape index: {}]
  %s2 = inlined_call_operand.vmem [shape: f32[1,256], index: 2, kind: input, shape index: {}]
  %s3 = inlined_call_operand.hbm [shape: bf16[256,128], index: 3, kind: input, shape index: {}]
  %s4 = inlined_call_operand.vmem [shape: f32[1,128], index: 4, kind: input, shape index: {}]
  %s5 = inlined_call_operand.hbm [shape: bf16[128,128], index: 5, kind: input, shape index: {}]
  %s6 = inlined_call_operand.vmem [shape: f32[1,128], index: 6, kind: input, shape index: {}]
  %s7 = inlined_call_operand.hbm [shape: bf16[16,128], index: 7, kind: output, shape index: {}]
  %s8 = sld [smem:[#allocation0]]
  $region54: #{tpu_custom_call.1} parent=0
    _
  %s10 = ssub.s32 1, %s8
  %s11 = scalar_select 0, %s10, %s8
  $region1: #{tpu_custom_call.1} parent=0
    #allocation2 [shape = 'u8[8192]{0}', space=vmem, size = 0x2000, scoped, tag = 'input window, operand 0, single buffered']
    #allocation3 [shape = 's32[1]{0}', space=sflag, size = 0x4, scoped, tag = 'scoped memory for tpu_custom_call.1']
    #allocation4 [shape = 's32[1]{0}', space=sflag, size = 0x4, scoped, tag = 'scoped memory for tpu_custom_call.1']
    #allocation5 [shape = 'u8[16384]{0}', space=vmem, size = 0x4000, scoped, tag = 'input window, operand 1, single buffered']
    #allocation6 [shape = 's32[1]{0}', space=sflag, size = 0x4, scoped, tag = 'scoped memory for tpu_custom_call.1']
    #allocation7 [shape = 'u8[65536]{0}', space=vmem, size = 0x10000, scoped, tag = 'input window, operand 3, single buffered']
    #allocation8 [shape = 'u8[32768]{0}', space=vmem, size = 0x8000, scoped, tag = 'input window, operand 5, single buffered']
    #allocation9 [shape = 's32[1]{0}', space=sflag, size = 0x4, scoped, tag = 'scoped memory for tpu_custom_call.1']
    #allocation10 [shape = 'u8[4096]{0}', space=vmem, size = 0x1000, scoped, tag = 'output window, operand 0, single buffered']
    %12 = vsyncpa [#allocation3], 0
    %13 = vsyncpa [#allocation6], 0
    %14 = vsyncpa [#allocation9], 0
    %15 = vsyncpa [#allocation4], 0
    // Predicated region
    $region2: #{tpu_custom_call.1} parent=1 // pred_check
      _
    $region3: #{tpu_custom_call.1} parent=1 // pred_check_branch
      %17 = sbr.rel (0) target = $region5
    $region4: #{tpu_custom_call.1} parent=1 // pred_region
      %s19 = ssub.s32 256, 256
      %20 = vsyncadd [#allocation3], %s19
      %s21 = sshll.u32 [#allocation2], 4
      %s22 = int_to_ptr.vmem [resolvable:$true] %s21
      %27 = dma.hbm_to_vmem [thread:$0]  %s0, 256, %s22, [#allocation3], 128, 128, 8
    $region5: #{tpu_custom_call.1} parent=1 // pred_fallthru
      _
    // Predicated region
    $region6: #{tpu_custom_call.1} parent=1 // pred_check
      _
    $region7: #{tpu_custom_call.1} parent=1 // pred_check_branch
      %29 = sbr.rel (0) target = $region9
    $region8: #{tpu_custom_call.1} parent=1 // pred_region
      %s31 = ssub.s32 512, 512
      %32 = vsyncadd [#allocation6], %s31
      %s33 = sshll.u32 [#allocation5], 4
      %s34 = int_to_ptr.vmem [resolvable:$true] %s33
      %39 = dma.hbm_to_vmem [thread:$0]  %s1, 512, %s34, [#allocation6], 128, 128, 8
    $region9: #{tpu_custom_call.1} parent=1 // pred_fallthru
      _
    // Predicated region
    $region10: #{tpu_custom_call.1} parent=1 // pred_check
      _
    $region11: #{tpu_custom_call.1} parent=1 // pred_check_branch
      %41 = sbr.rel (0) target = $region13
    $region12: #{tpu_custom_call.1} parent=1 // pred_region
      _
    $region13: #{tpu_custom_call.1} parent=1 // pred_fallthru
      _
    // Predicated region
    $region14: #{tpu_custom_call.1} parent=1 // pred_check
      _
    $region15: #{tpu_custom_call.1} parent=1 // pred_check_branch
      %43 = sbr.rel (0) target = $region17
    $region16: #{tpu_custom_call.1} parent=1 // pred_region
      %s45 = ssub.s32 2048, 2048
      %46 = vsyncadd [#allocation6], %s45
      %s47 = sshll.u32 [#allocation7], 4
      %s48 = int_to_ptr.vmem [resolvable:$true] %s47
      %53 = dma.hbm_to_vmem [thread:$0]  %s3, 2048, %s48, [#allocation6], 64, 64, 4
    $region17: #{tpu_custom_call.1} parent=1 // pred_fallthru
      _
    // Predicated region
    $region18: #{tpu_custom_call.1} parent=1 // pred_check
      _
    $region19: #{tpu_custom_call.1} parent=1 // pred_check_branch
      %55 = sbr.rel (0) target = $region21
    $region20: #{tpu_custom_call.1} parent=1 // pred_region
      _
    $region21: #{tpu_custom_call.1} parent=1 // pred_fallthru
      _
    // Predicated region
    $region22: #{tpu_custom_call.1} parent=1 // pred_check
      _
    $region23: #{tpu_custom_call.1} parent=1 // pred_check_branch
      %57 = sbr.rel (0) target = $region25
    $region24: #{tpu_custom_call.1} parent=1 // pred_region
      %s59 = ssub.s32 1024, 1024
      %60 = vsyncadd [#allocation9], %s59
      %s61 = sshll.u32 [#allocation8], 4
      %s62 = int_to_ptr.vmem [resolvable:$true] %s61
      %67 = dma.hbm_to_vmem [thread:$0]  %s5, 1024, %s62, [#allocation9], 64, 64, 4
    $region25: #{tpu_custom_call.1} parent=1 // pred_fallthru
      _
    // Predicated region
    $region26: #{tpu_custom_call.1} parent=1 // pred_check
      _
    $region27: #{tpu_custom_call.1} parent=1 // pred_check_branch
      %69 = sbr.rel (0) target = $region29
    $region28: #{tpu_custom_call.1} parent=1 // pred_region
      _
    $region29: #{tpu_custom_call.1} parent=1 // pred_fallthru
      _
    // Predicated region
    $region30: #{tpu_custom_call.1} parent=1 // pred_check
      _
    $region31: #{tpu_custom_call.1} parent=1 // pred_check_branch
      %71 = sbr.rel (0) target = $region33
    $region32: #{tpu_custom_call.1} parent=1 // pred_region
      %72 = dma.done [#allocation3], 256
    $region33: #{tpu_custom_call.1} parent=1 // pred_fallthru
      _
    // Predicated region
    $region34: #{tpu_custom_call.1} parent=1 // pred_check
      _
    $region35: #{tpu_custom_call.1} parent=1 // pred_check_branch
      %74 = sbr.rel (0) target = $region37
    $region36: #{tpu_custom_call.1} parent=1 // pred_region
      %75 = dma.done [#allocation6], 512
    $region37: #{tpu_custom_call.1} parent=1 // pred_fallthru
      _
    // Predicated region
    $region38: #{tpu_custom_call.1} parent=1 // pred_check
      _
    $region39: #{tpu_custom_call.1} parent=1 // pred_check_branch
      %77 = sbr.rel (0) target = $region41
    $region40: #{tpu_custom_call.1} parent=1 // pred_region
      %78 = dma.done [#allocation6], 2048
    $region41: #{tpu_custom_call.1} parent=1 // pred_fallthru
      _
    // Predicated region
    $region42: #{tpu_custom_call.1} parent=1 // pred_check
      _
    $region43: #{tpu_custom_call.1} parent=1 // pred_check_branch
      %80 = sbr.rel (0) target = $region45
    $region44: #{tpu_custom_call.1} parent=1 // pred_region
      %81 = dma.done [#allocation9], 1024
    $region45: #{tpu_custom_call.1} parent=1 // pred_fallthru
      _
    %v83 = vld [vmem:[#allocation2] sm:$0xff]
    %v84 = vld [vmem:[#allocation2 + $0x8] sm:$0xff]
    %v85 = vpack.c.bf16 %v84, %v83
    %v86 = vld [vmem:[#allocation5] sm:$0xff]
    %v87 = vld [vmem:[#allocation5 + $0x8] sm:$0xff]
    %v88 = vld [vmem:[#allocation5 + $0x10] sm:$0xff]
    %v89 = vld [vmem:[#allocation5 + $0x18] sm:$0xff]
    %v90 = vld [vmem:[%s2] sm:$0x3]
    %v92 = vlaneseq
    %v93 = vshrl.u32 %v92, 7
    %v94 = vsub.s32 0, %v93
    %v95 = vrot.slane %v90, %v94
    %v96 = vlaneseq
    %v97 = vshrl.u32 %v96, 7
    %v98 = vsub.s32 1, %v97
    %v99 = vrot.slane %v90, %v98
    %v106 = vunpack.c.l.b16 %v86
    %v107 = vunpack.c.h.b16 %v86
    %v108 = vunpack.c.l.b16 %v87
    %v109 = vunpack.c.h.b16 %v87
    %v110 = vunpack.c.l.b16 %v88
    %v111 = vunpack.c.h.b16 %v88
    %v112 = vunpack.c.l.b16 %v89
    %v113 = vunpack.c.h.b16 %v89
    %v114 = vpack.c.b16 %v108, %v106
    %v115 = vpack.c.b16 %v109, %v107
    %v116 = vpack.c.b16 %v112, %v110
    %v117 = vpack.c.b16 %v113, %v111
    %vm122 = vcmask 261120
    %v124 = vsel %vm122, %v85, 0
    %126 = vmatprep.subr.bf16.mxu0 %v115
    %127 = vmatpush1.bf16.msra.mxu0 %v114
    %128 = vmatprep.subr.bf16.mxu0 %v117
    %129 = vmatpush1.bf16.msra.mxu0 %v116
    %130 = vmatprep.subr.bf16.mxu0 0
    %131 = vmatpush1.bf16.msra.mxu0 0
    %132 = vmatprep.subr.bf16.mxu0 0
    %133 = vmatpush1.bf16.msra.mxu0 0
    %134 = vmatprep.subr.bf16.mxu0 0
    %135 = vmatpush1.bf16.msra.mxu0 0
    %136 = vmatprep.subr.bf16.mxu0 0
    %137 = vmatpush1.bf16.msra.mxu0 0
    %138 = vmatprep.subr.bf16.mxu0 0
    %139 = vmatpush1.bf16.msra.mxu0 0
    %140 = vmatprep.subr.bf16.mxu0 0
    %141 = vmatpush1.bf16.msra.mxu0 0
    %142 = vmatprep.subr.bf16.mxu0 0
    %143 = vmatpush1.bf16.msra.mxu0 0
    %144 = vmatprep.subr.bf16.mxu0 0
    %145 = vmatpush1.bf16.msra.mxu0 0
    %146 = vmatprep.subr.bf16.mxu0 0
    %147 = vmatpush1.bf16.msra.mxu0 0
    %148 = vmatprep.subr.bf16.mxu0 0
    %149 = vmatpush1.bf16.msra.mxu0 0
    %150 = vmatprep.subr.bf16.mxu0 0
    %151 = vmatpush1.bf16.msra.mxu0 0
    %152 = vmatprep.subr.bf16.mxu0 0
    %153 = vmatpush1.bf16.msra.mxu0 0
    %154 = vmatprep.subr.bf16.mxu0 0
    %155 = vmatpush1.bf16.msra.mxu0 0
    %156 = vmatprep.subr.bf16.mxu0 0
    %157 = vmatpush1.bf16.msra.mxu0 0
    %158 = vmatprep.mubr.bf16.mxu0 0
    %159 = vmatmul.mubr.bf16.gmra.mrb[0].mxu0 %v124
    %v160 = vpop.f32.mrb[0].mxu0
    %v161 = vadd.f32 %v95, %v160
    %v162 = vpop.f32.mrb[0].mxu0
    %v163 = vadd.f32 %v99, %v162
    %v164 = vpop.f32.mrb[0].mxu0
    %v165 = vadd.f32 %v95, %v164
    %v166 = vpop.f32.mrb[0].mxu0
    %v167 = vadd.f32 %v99, %v166
    %168 = vdwg.mxu0
    %v169 = vmax.f32 %v161, 0.0
    %v170 = vmax.f32 %v163, 0.0
    %v171 = vmax.f32 %v165, 0.0
    %v172 = vmax.f32 %v167, 0.0
    %v173 = vpack.c.bf16 %v171, %v169
    %v174 = vpack.c.bf16 %v172, %v170
    %v175 = vld [vmem:[#allocation7] sm:$0xf]
    %v176 = vld [vmem:[#allocation7 + $0x4] sm:$0xf]
    %v177 = vld [vmem:[#allocation7 + $0x8] sm:$0xf]
    %v178 = vld [vmem:[#allocation7 + $0xc] sm:$0xf]
    %v179 = vld [vmem:[#allocation7 + $0x10] sm:$0xf]
    %v180 = vld [vmem:[#allocation7 + $0x14] sm:$0xf]
    %v181 = vld [vmem:[#allocation7 + $0x18] sm:$0xf]
    %v182 = vld [vmem:[#allocation7 + $0x1c] sm:$0xf]
    %v183 = vld [vmem:[#allocation7 + $0x20] sm:$0xf]
    %v184 = vld [vmem:[#allocation7 + $0x24] sm:$0xf]
    %v185 = vld [vmem:[#allocation7 + $0x28] sm:$0xf]
    %v186 = vld [vmem:[#allocation7 + $0x2c] sm:$0xf]
    %v187 = vld [vmem:[#allocation7 + $0x30] sm:$0xf]
    %v188 = vld [vmem:[#allocation7 + $0x34] sm:$0xf]
    %v189 = vld [vmem:[#allocation7 + $0x38] sm:$0xf]
    %v190 = vld [vmem:[#allocation7 + $0x3c] sm:$0xf]
    %v191 = vld [vmem:[#allocation7 + $0x40] sm:$0xf]
    %v192 = vld [vmem:[#allocation7 + $0x44] sm:$0xf]
    %v193 = vld [vmem:[#allocation7 + $0x48] sm:$0xf]
    %v194 = vld [vmem:[#allocation7 + $0x4c] sm:$0xf]
    %v195 = vld [vmem:[#allocation7 + $0x50] sm:$0xf]
    %v196 = vld [vmem:[#allocation7 + $0x54] sm:$0xf]
    %v197 = vld [vmem:[#allocation7 + $0x58] sm:$0xf]
    %v198 = vld [vmem:[#allocation7 + $0x5c] sm:$0xf]
    %v199 = vld [vmem:[#allocation7 + $0x60] sm:$0xf]
    %v200 = vld [vmem:[#allocation7 + $0x64] sm:$0xf]
    %v201 = vld [vmem:[#allocation7 + $0x68] sm:$0xf]
    %v202 = vld [vmem:[#allocation7 + $0x6c] sm:$0xf]
    %v203 = vld [vmem:[#allocation7 + $0x70] sm:$0xf]
    %v204 = vld [vmem:[#allocation7 + $0x74] sm:$0xf]
    %v205 = vld [vmem:[#allocation7 + $0x78] sm:$0xf]
    %v206 = vld [vmem:[#allocation7 + $0x7c] sm:$0xf]
    %v207 = vld [vmem:[%s4] sm:$0x1]
    %v209 = vlaneseq
    %v210 = vshrl.u32 %v209, 7
    %v211 = vsub.s32 0, %v210
    %v212 = vrot.slane %v207, %v211
    %v246 = vunpack.c.l.b16 %v175
    %v247 = vunpack.c.l.b16 %v176
    %v248 = vunpack.c.l.b16 %v177
    %v249 = vunpack.c.l.b16 %v178
    %v250 = vunpack.c.l.b16 %v179
    %v251 = vunpack.c.l.b16 %v180
    %v252 = vunpack.c.l.b16 %v181
    %v253 = vunpack.c.l.b16 %v182
    %v254 = vunpack.c.l.b16 %v183
    %v255 = vunpack.c.l.b16 %v184
    %v256 = vunpack.c.l.b16 %v185
    %v257 = vunpack.c.l.b16 %v186
    %v258 = vunpack.c.l.b16 %v187
    %v259 = vunpack.c.l.b16 %v188
    %v260 = vunpack.c.l.b16 %v189
    %v261 = vunpack.c.l.b16 %v190
    %v262 = vunpack.c.l.b16 %v191
    %v263 = vunpack.c.l.b16 %v192
    %v264 = vunpack.c.l.b16 %v193
    %v265 = vunpack.c.l.b16 %v194
    %v266 = vunpack.c.l.b16 %v195
    %v267 = vunpack.c.l.b16 %v196
    %v268 = vunpack.c.l.b16 %v197
    %v269 = vunpack.c.l.b16 %v198
    %v270 = vunpack.c.l.b16 %v199
    %v271 = vunpack.c.l.b16 %v200
    %v272 = vunpack.c.l.b16 %v201
    %v273 = vunpack.c.l.b16 %v202
    %v274 = vunpack.c.l.b16 %v203
    %v275 = vunpack.c.l.b16 %v204
    %v276 = vunpack.c.l.b16 %v205
    %v277 = vunpack.c.l.b16 %v206
    %v278 = vpack.c.b16 %v247, %v246
    %v279 = vpack.c.b16 %v249, %v248
    %v280 = vpack.c.b16 %v251, %v250
    %v281 = vpack.c.b16 %v253, %v252
    %v282 = vpack.c.b16 %v255, %v254
    %v283 = vpack.c.b16 %v257, %v256
    %v284 = vpack.c.b16 %v259, %v258
    %v285 = vpack.c.b16 %v261, %v260
    %v286 = vpack.c.b16 %v263, %v262
    %v287 = vpack.c.b16 %v265, %v264
    %v288 = vpack.c.b16 %v267, %v266
    %v289 = vpack.c.b16 %v269, %v268
    %v290 = vpack.c.b16 %v271, %v270
    %v291 = vpack.c.b16 %v273, %v272
    %v292 = vpack.c.b16 %v275, %v274
    %v293 = vpack.c.b16 %v277, %v276
    %310 = vmatprep.subr.bf16.mxu0 0
    %311 = vmatpush1.bf16.msra.mxu0 %v278
    %312 = vmatprep.subr.bf16.mxu0 0
    %313 = vmatpush1.bf16.msra.mxu0 %v279
    %314 = vmatprep.subr.bf16.mxu0 0
    %315 = vmatpush1.bf16.msra.mxu0 %v280
    %316 = vmatprep.subr.bf16.mxu0 0
    %317 = vmatpush1.bf16.msra.mxu0 %v281
    %318 = vmatprep.subr.bf16.mxu0 0
    %319 = vmatpush1.bf16.msra.mxu0 %v282
    %320 = vmatprep.subr.bf16.mxu0 0
    %321 = vmatpush1.bf16.msra.mxu0 %v283
    %322 = vmatprep.subr.bf16.mxu0 0
    %323 = vmatpush1.bf16.msra.mxu0 %v284
    %324 = vmatprep.subr.bf16.mxu0 0
    %325 = vmatpush1.bf16.msra.mxu0 %v285
    %326 = vmatprep.subr.bf16.mxu0 0
    %327 = vmatpush1.bf16.msra.mxu0 %v286
    %328 = vmatprep.subr.bf16.mxu0 0
    %329 = vmatpush1.bf16.msra.mxu0 %v287
    %330 = vmatprep.subr.bf16.mxu0 0
    %331 = vmatpush1.bf16.msra.mxu0 %v288
    %332 = vmatprep.subr.bf16.mxu0 0
    %333 = vmatpush1.bf16.msra.mxu0 %v289
    %334 = vmatprep.subr.bf16.mxu0 0
    %335 = vmatpush1.bf16.msra.mxu0 %v290
    %336 = vmatprep.subr.bf16.mxu0 0
    %337 = vmatpush1.bf16.msra.mxu0 %v291
    %338 = vmatprep.subr.bf16.mxu0 0
    %339 = vmatpush1.bf16.msra.mxu0 %v292
    %340 = vmatprep.subr.bf16.mxu0 0
    %341 = vmatpush1.bf16.msra.mxu0 %v293
    %342 = vmatprep.mubr.bf16.mxu0 %v174
    %343 = vmatmul.mubr.bf16.gmra.mrb[0].mxu0 %v173
    %v344 = vpop.f32.mrb[0].mxu0
    %v345 = vadd.f32 %v212, %v344
    %v346 = vpop.f32.mrb[0].mxu0
    %v347 = vpop.f32.mrb[0].mxu0
    %v348 = vadd.f32 %v212, %v347
    %v349 = vpop.f32.mrb[0].mxu0
    %350 = vdwg.mxu0
    %v351 = vmax.f32 %v345, 0.0
    %v352 = vmax.f32 %v348, 0.0
    %v353 = vpack.c.bf16 %v352, %v351
    %v354 = vld [vmem:[#allocation8] sm:$0xf]
    %v355 = vld [vmem:[#allocation8 + $0x4] sm:$0xf]
    %v356 = vld [vmem:[#allocation8 + $0x8] sm:$0xf]
    %v357 = vld [vmem:[#allocation8 + $0xc] sm:$0xf]
    %v358 = vld [vmem:[#allocation8 + $0x10] sm:$0xf]
    %v359 = vld [vmem:[#allocation8 + $0x14] sm:$0xf]
    %v360 = vld [vmem:[#allocation8 + $0x18] sm:$0xf]
    %v361 = vld [vmem:[#allocation8 + $0x1c] sm:$0xf]
    %v362 = vld [vmem:[#allocation8 + $0x20] sm:$0xf]
    %v363 = vld [vmem:[#allocation8 + $0x24] sm:$0xf]
    %v364 = vld [vmem:[#allocation8 + $0x28] sm:$0xf]
    %v365 = vld [vmem:[#allocation8 + $0x2c] sm:$0xf]
    %v366 = vld [vmem:[#allocation8 + $0x30] sm:$0xf]
    %v367 = vld [vmem:[#allocation8 + $0x34] sm:$0xf]
    %v368 = vld [vmem:[#allocation8 + $0x38] sm:$0xf]
    %v369 = vld [vmem:[#allocation8 + $0x3c] sm:$0xf]
    %v370 = vld [vmem:[%s6] sm:$0x1]
    %v372 = vlaneseq
    %v373 = vshrl.u32 %v372, 7
    %v374 = vsub.s32 0, %v373
    %v375 = vrot.slane %v370, %v374
    %v393 = vunpack.c.l.b16 %v354
    %v394 = vunpack.c.l.b16 %v355
    %v395 = vunpack.c.l.b16 %v356
    %v396 = vunpack.c.l.b16 %v357
    %v397 = vunpack.c.l.b16 %v358
    %v398 = vunpack.c.l.b16 %v359
    %v399 = vunpack.c.l.b16 %v360
    %v400 = vunpack.c.l.b16 %v361
    %v401 = vunpack.c.l.b16 %v362
    %v402 = vunpack.c.l.b16 %v363
    %v403 = vunpack.c.l.b16 %v364
    %v404 = vunpack.c.l.b16 %v365
    %v405 = vunpack.c.l.b16 %v366
    %v406 = vunpack.c.l.b16 %v367
    %v407 = vunpack.c.l.b16 %v368
    %v408 = vunpack.c.l.b16 %v369
    %v409 = vpack.c.b16 %v394, %v393
    %v410 = vpack.c.b16 %v396, %v395
    %v411 = vpack.c.b16 %v398, %v397
    %v412 = vpack.c.b16 %v400, %v399
    %v413 = vpack.c.b16 %v402, %v401
    %v414 = vpack.c.b16 %v404, %v403
    %v415 = vpack.c.b16 %v406, %v405
    %v416 = vpack.c.b16 %v408, %v407
    %425 = vmatprep.subr.bf16.mxu0 0
    %426 = vmatpush1.bf16.msra.mxu0 %v409
    %427 = vmatprep.subr.bf16.mxu0 0
    %428 = vmatpush1.bf16.msra.mxu0 %v410
    %429 = vmatprep.subr.bf16.mxu0 0
    %430 = vmatpush1.bf16.msra.mxu0 %v411
    %431 = vmatprep.subr.bf16.mxu0 0
    %432 = vmatpush1.bf16.msra.mxu0 %v412
    %433 = vmatprep.subr.bf16.mxu0 0
    %434 = vmatpush1.bf16.msra.mxu0 %v413
    %435 = vmatprep.subr.bf16.mxu0 0
    %436 = vmatpush1.bf16.msra.mxu0 %v414
    %437 = vmatprep.subr.bf16.mxu0 0
    %438 = vmatpush1.bf16.msra.mxu0 %v415
    %439 = vmatprep.subr.bf16.mxu0 0
    %440 = vmatpush1.bf16.msra.mxu0 %v416
    %441 = vmatprep.subr.bf16.mxu0 0
    %442 = vmatpush1.bf16.msra.mxu0 0
    %443 = vmatprep.subr.bf16.mxu0 0
    %444 = vmatpush1.bf16.msra.mxu0 0
    %445 = vmatprep.subr.bf16.mxu0 0
    %446 = vmatpush1.bf16.msra.mxu0 0
    %447 = vmatprep.subr.bf16.mxu0 0
    %448 = vmatpush1.bf16.msra.mxu0 0
    %449 = vmatprep.subr.bf16.mxu0 0
    %450 = vmatpush1.bf16.msra.mxu0 0
    %451 = vmatprep.subr.bf16.mxu0 0
    %452 = vmatpush1.bf16.msra.mxu0 0
    %453 = vmatprep.subr.bf16.mxu0 0
    %454 = vmatpush1.bf16.msra.mxu0 0
    %455 = vmatprep.subr.bf16.mxu0 0
    %456 = vmatpush1.bf16.msra.mxu0 0
    %457 = vmatprep.mubr.bf16.mxu0 0
    %458 = vmatmul.mubr.bf16.gmra.mrb[0].mxu0 %v353
    %v459 = vpop.f32.mrb[0].mxu0
    %v460 = vadd.f32 %v375, %v459
    %v461 = vpop.f32.mrb[0].mxu0
    %v462 = vpop.f32.mrb[0].mxu0
    %v463 = vadd.f32 %v375, %v462
    %v464 = vpop.f32.mrb[0].mxu0
    %465 = vdwg.mxu0
    %v466 = vpack.c.bf16 %v463, %v460
    %v468 = vunpack.c.l.b16 %v466
    %v469 = vunpack.c.h.b16 %v466
    %v470 = vpack.c.b16 %v468, %v468
    %v471 = vpack.c.b16 %v469, %v469
    %474 = vst [vmem:[#allocation10] sm:$0xf] %v470
    %475 = vst [vmem:[#allocation10 + $0x4] sm:$0xf] %v471
    // Predicated region
    $region46: #{tpu_custom_call.1} parent=1 // pred_check
      _
    $region47: #{tpu_custom_call.1} parent=1 // pred_check_branch
      %477 = sbr.rel (0) target = $region49
    $region48: #{tpu_custom_call.1} parent=1 // pred_region
      %s479 = ssub.s32 128, 128
      %480 = vsyncadd [#allocation4], %s479
      %s481 = sshll.u32 [#allocation10], 4
      %s482 = int_to_ptr.vmem [resolvable:$true] %s481
      %487 = dma.vmem_to_hbm [thread:$0]  %s482, 128, %s7, [#allocation4], 64, 64, 4
    $region49: #{tpu_custom_call.1} parent=1 // pred_fallthru
      _
    // Predicated region
    $region50: #{tpu_custom_call.1} parent=1 // pred_check
      _
    $region51: #{tpu_custom_call.1} parent=1 // pred_check_branch
      %489 = sbr.rel (0) target = $region53
    $region52: #{tpu_custom_call.1} parent=1 // pred_region
      %490 = dma.done [#allocation4], 128
    $region53: #{tpu_custom_call.1} parent=1 // pred_fallthru
      _
    %491 = vsyncpa [#allocation3], 1
    %492 = vsyncpa [#allocation6], 1
    %493 = vsyncpa [#allocation9], 1
    %494 = vsyncpa [#allocation4], 1

</llo_original>
